<compile_context>
chip_gen: v6e
topology: v6e:2x2x1
jax: 0.10.0
libtpu: 0.0.40
codegen_flags: <defaults>
</compile_context>

<pallas_src>
import functools

import jax
import jax.numpy as jnp
from jax import lax
from jax.experimental import pallas as pl
from jax.experimental.pallas import tpu as pltpu


# -----------------------------------------------------------------------------
# Scaled dot-product attention kernel
# -----------------------------------------------------------------------------
def _sdpa_kernel(*refs, inv_temperature, mask_mode):
    """One (batch, head, q-tile) grid step. Blocks are (1, 1, rows, cols)."""
    if mask_mode == "none":
        q_ref, k_ref, v_ref, out_ref, attn_ref = refs
        mask_ref = None
    else:
        q_ref, k_ref, v_ref, mask_ref, out_ref, attn_ref = refs

    q = q_ref[0, 0]                      # (Tq, Dk)  native dtype -> MXU
    k = k_ref[0, 0]                      # (Lk, Dk)
    v = v_ref[0, 0]                      # (Lk, Dv)

    # q @ k^T without an explicit transpose: contract Dk (dim 1) vs Dk (dim 1).
    s = lax.dot_general(q, k, (((1,), (1,)), ((), ())),
                        preferred_element_type=jnp.float32)       # (Tq, Lk) f32
    s = s * inv_temperature              # fold 1/temperature into f32 scores

    if mask_mode == "keep":
        # {0,1} keep-mask -> additive mask, computed on the VPU per tile.
        m = mask_ref[0, 0].astype(jnp.float32)
        s = s + (1.0 - m) * -1000000000.0
    elif mask_mode == "additive":
        s = s + mask_ref[0, 0].astype(jnp.float32)

    # Numerically stable softmax over keys.
    s_max = jnp.max(s, axis=-1, keepdims=True)
    e = jnp.exp(s - s_max)
    denom = jnp.sum(e, axis=-1, keepdims=True)
    r = pl.reciprocal(denom, approx=True)        # EUP slot (cheap)
    r = r * (2.0 - denom * r)                    # one Newton step -> ~f32 exact
    p = e * r                                    # (Tq, Lk) f32

    p_cast = p.astype(v_ref.dtype)               # torch: softmax(...).to(v.dtype)
    attn_ref[0, 0] = p_cast.astype(attn_ref.dtype)

    out = jnp.dot(p_cast, v, preferred_element_type=jnp.float32)
    out_ref[0, 0] = out.astype(out_ref.dtype)


def _pick_q_tile(Lq, Lk, Dk, Dv, qkv_itemsize, out_itemsize, mask_itemsize,
                 budget_bytes):
    """Largest Lq tile whose double-buffered working set fits the budget."""
    candidates = [t for t in (1024, 512, 256, 128, 64, 32, 16, 8)
                  if t <= Lq and Lq % t == 0]
    if not candidates:
        return Lq                                        # ragged Lq: one full tile
    for tq in candidates:
        blk = 2 * (tq * Dk + Lk * Dk + Lk * Dv) * qkv_itemsize   # q, k, v blocks
        blk += 2 * (tq * Dv + tq * Lk) * out_itemsize            # out, attn blocks
        blk += 2 * tq * Lk * mask_itemsize                       # mask block
        blk += 3 * tq * Lk * 4                                   # f32 s/e/p temps
        if blk <= budget_bytes:
            return tq
    return candidates[-1]


def scaled_dot_product_attention(q, k, v, temperature, mask=None):
    """Pallas equivalent of ScaledDotProductAttention.forward (eval mode).

    q: (B, H, Lq, Dk), k: (B, H, Lk, Dk), v: (B, H, Lk, Dv)
    mask: None, (B, Lq, Lk) keep-mask in {0,1}, or 4-D additive mask with head
          dim 1 or H. Returns (output (B,H,Lq,Dv), attn_prob (B,H,Lq,Lk)).
    """
    B, H, Lq, Dk = q.shape
    Lk = k.shape[2]
    Dv = v.shape[3]

    # --- mask preprocessing: keep it narrow, never broadcast over heads ---
    mask_mode = "none"
    if mask is not None:
        mask = jnp.asarray(mask)
        if mask.ndim == 3:
            mask_mode = "keep"                 # raw {0,1} mask, converted in-kernel
            mask = mask[:, None, :, :]
        else:
            mask_mode = "additive"
        if not jnp.issubdtype(mask.dtype, jnp.floating):
            mask = mask.astype(jnp.float32)
        Hm = mask.shape[1]                      # 1 or H (no H blow-up in HBM)
        mask = jnp.broadcast_to(mask, (B, Hm, Lq, Lk))

    # --- VMEM budgeting + Lq tiling ---
    try:
        phys_vmem = int(pltpu.get_tpu_info().vmem_capacity_bytes)
    except Exception:                           # info unavailable -> assume v7x
        phys_vmem = 64 * 1024 * 1024
    vmem_limit = int(min(phys_vmem * 0.7, 96 * 1024 * 1024))
    mask_itemsize = mask.dtype.itemsize if mask is not None else 0
    Tq = _pick_q_tile(Lq, Lk, Dk, Dv,
                      qkv_itemsize=q.dtype.itemsize,
                      out_itemsize=v.dtype.itemsize,
                      mask_itemsize=mask_itemsize,
                      budget_bytes=vmem_limit // 2)

    grid = (B, H, Lq // Tq)

    q_spec = pl.BlockSpec((1, 1, Tq, Dk), lambda b, h, i: (b, h, i, 0))
    k_spec = pl.BlockSpec((1, 1, Lk, Dk), lambda b, h, i: (b, h, 0, 0))
    v_spec = pl.BlockSpec((1, 1, Lk, Dv), lambda b, h, i: (b, h, 0, 0))
    out_specs = [
        pl.BlockSpec((1, 1, Tq, Dv), lambda b, h, i: (b, h, i, 0)),
        pl.BlockSpec((1, 1, Tq, Lk), lambda b, h, i: (b, h, i, 0)),
    ]
    out_shape = (
        jax.ShapeDtypeStruct((B, H, Lq, Dv), q.dtype),
        jax.ShapeDtypeStruct((B, H, Lq, Lk), v.dtype),
    )

    in_specs = [q_spec, k_spec, v_spec]
    args = [q, k, v]
    if mask is not None:
        if mask.shape[1] == 1:
            m_spec = pl.BlockSpec((1, 1, Tq, Lk), lambda b, h, i: (b, 0, i, 0))
        else:
            m_spec = pl.BlockSpec((1, 1, Tq, Lk), lambda b, h, i: (b, h, i, 0))
        in_specs.append(m_spec)
        args.append(mask)

    kernel = functools.partial(_sdpa_kernel,
                               inv_temperature=1.0 / float(temperature),
                               mask_mode=mask_mode)

    return pl.pallas_call(
        kernel,
        out_shape=out_shape,
        grid_spec=pltpu.PrefetchScalarGridSpec(
            num_scalar_prefetch=0,
            grid=grid,
            in_specs=in_specs,
            out_specs=out_specs,
        ),
        compiler_params=pltpu.CompilerParams(
            dimension_semantics=("parallel", "parallel", "parallel"),
            vmem_limit_bytes=vmem_limit,
        ),
    )(*args)


# -----------------------------------------------------------------------------
# MultiHeadAttention forward (eval mode) around the Pallas SDPA kernel
# -----------------------------------------------------------------------------
def init_mha_params(key, n_head, d_model, d_k, d_v, dtype=jnp.float32):
    ks = jax.random.split(key, 8)

    def lin(kw, kb, fan_in, fan_out):
        bound = 1.0 / (fan_in ** 0.5)
        w = jax.random.uniform(kw, (fan_in, fan_out), dtype, -bound, bound)
        b = jax.random.uniform(kb, (fan_out,), dtype, -bound, bound)
        return w, b

    w_qs, b_qs = lin(ks[0], ks[1], d_model, n_head * d_k)
    w_ks, b_ks = lin(ks[2], ks[3], d_model, n_head * d_k)
    w_vs, b_vs = lin(ks[4], ks[5], d_model, n_head * d_v)
    w_fc, b_fc = lin(ks[6], ks[7], n_head * d_v, d_model)
    return dict(w_qs=w_qs, b_qs=b_qs, w_ks=w_ks, b_ks=b_ks, w_vs=w_vs, b_vs=b_vs,
                w_fc=w_fc, b_fc=b_fc,
                ln_gamma=jnp.ones((d_model,), dtype),
                ln_beta=jnp.zeros((d_model,), dtype))


def multi_head_attention(params, q, k, v, mask=None, *, n_head, d_k, d_v):
    """Eval-mode forward of the PyTorch MultiHeadAttention module."""
    B, Lq, _ = q.shape
    Lk = k.shape[1]
    Lv = v.shape[1]
    residual = q

    def proj(x, w, b, L, d):
        y = jnp.dot(x, w) + b
        return y.reshape(B, L, n_head, d).transpose(0, 2, 1, 3)   # (B, H, L, d)

    qh = proj(q, params["w_qs"], params["b_qs"], Lq, d_k)
    kh = proj(k, params["w_ks"], params["b_ks"], Lk, d_k)
    vh = proj(v, params["w_vs"], params["b_vs"], Lv, d_v)

    if mask is not None:
        mask = jnp.asarray(mask)[:, None]     # torch: mask.unsqueeze(1) -> 4-D, added as-is

    out, attn = scaled_dot_product_attention(qh, kh, vh, float(d_k) ** 0.5, mask)

    out = out.transpose(0, 2, 1, 3).reshape(B, Lq, n_head * d_v)
    out = jnp.dot(out, params["w_fc"]) + params["b_fc"]
    # TODO(synk): dropout is identity here (eval-mode semantics).
    out = out + residual

    mean = jnp.mean(out, axis=-1, keepdims=True)
    var = jnp.mean(jnp.square(out - mean), axis=-1, keepdims=True)
    out = (out - mean) * lax.rsqrt(var + 1e-6)
    out = out * params["ln_gamma"] + params["ln_beta"]
    return out, attn, 0


# -----------------------------------------------------------------------------
# Pure-JAX references (mirror the PyTorch module)
# -----------------------------------------------------------------------------
def _sdpa_reference(q, k, v, temperature, mask=None):
    attn = jnp.einsum("bhqd,bhkd->bhqk", q / temperature, k).astype(jnp.float32)
    if mask is not None:
        m = jnp.asarray(mask)
        if m.ndim == 3:
            m = ((1.0 - m.astype(jnp.float32)) * -1000000000.0)[:, None, :, :]
        attn = attn + m.astype(jnp.float32)
    p = jax.nn.softmax(attn, axis=-1).astype(v.dtype)
    out = jnp.einsum("bhqk,bhkd->bhqd", p, v)
    return out, p


def _mha_reference(params, q, k, v, mask=None, *, n_head, d_k, d_v):
    B, Lq, _ = q.shape
    Lk = k.shape[1]
    Lv = v.shape[1]
    residual = q
    qh = (jnp.dot(q, params["w_qs"]) + params["b_qs"]).reshape(B, Lq, n_head, d_k).transpose(0, 2, 1, 3)
    kh = (jnp.dot(k, params["w_ks"]) + params["b_ks"]).reshape(B, Lk, n_head, d_k).transpose(0, 2, 1, 3)
    vh = (jnp.dot(v, params["w_vs"]) + params["b_vs"]).reshape(B, Lv, n_head, d_v).transpose(0, 2, 1, 3)
    m4 = None if mask is None else jnp.asarray(mask)[:, None]
    o, attn = _sdpa_reference(qh, kh, vh, float(d_k) ** 0.5, m4)
    o = o.transpose(0, 2, 1, 3).reshape(B, Lq, n_head * d_v)
    o = jnp.dot(o, params["w_fc"]) + params["b_fc"] + residual
    mean = jnp.mean(o, axis=-1, keepdims=True)
    var = jnp.mean(jnp.square(o - mean), axis=-1, keepdims=True)
    o = (o - mean) / jnp.sqrt(var + 1e-6)
    return o * params["ln_gamma"] + params["ln_beta"], attn, 0


if __name__ == "__main__":
    key = jax.random.PRNGKey(0)
    k_sdpa, k_mha, k_mask = jax.random.split(key, 3)

    # --- 1) raw scaled-dot-product attention kernel, {0,1} keep-mask path ---
    kq, kk, kv = jax.random.split(k_sdpa, 3)
    B, H, L, Dk, Dv = 2, 4, 8, 32, 32
    temperature = float(Dk) ** 0.5
    q = jax.random.normal(kq, (B, H, L, Dk), dtype=jnp.float32)
    k = jax.random.normal(kk, (B, H, L, Dk), dtype=jnp.float32)
    v = jax.random.normal(kv, (B, H, L, Dv), dtype=jnp.float32)
    mask = (jax.random.uniform(k_mask, (B, L, L)) > 0.3).astype(jnp.float32)
    mask = mask.at[:, :, 0].set(1.0)    # keep >=1 visible key per query row

    out, attn = scaled_dot_product_attention(q, k, v, temperature, mask)
    out = jax.block_until_ready(out)
    attn = jax.block_until_ready(attn)
    ref_out, ref_attn = _sdpa_reference(q, k, v, temperature, mask)
    assert jnp.allclose(out, ref_out, atol=2e-5, rtol=2e-5), "sdpa output mismatch"
    assert jnp.allclose(attn, ref_attn, atol=2e-5, rtol=2e-5), "sdpa attn mismatch"

    out2, attn2 = scaled_dot_product_attention(q, k, v, temperature, None)
    jax.block_until_ready(out2)
    ref_out2, ref_attn2 = _sdpa_reference(q, k, v, temperature, None)
    assert jnp.allclose(out2, ref_out2, atol=2e-5, rtol=2e-5), "sdpa nomask output mismatch"
    assert jnp.allclose(attn2, ref_attn2, atol=2e-5, rtol=2e-5), "sdpa nomask attn mismatch"

    # --- 2) full MultiHeadAttention forward (eval mode) ---
    n_head, d_model, d_k, d_v, Lm, Bm = 4, 32, 8, 8, 8, 2
    kp, kq2, kk2, kv2, km2 = jax.random.split(k_mha, 5)
    params = init_mha_params(kp, n_head, d_model, d_k, d_v)
    xq = jax.random.normal(kq2, (Bm, Lm, d_model), dtype=jnp.float32)
    xk = jax.random.normal(kk2, (Bm, Lm, d_model), dtype=jnp.float32)
    xv = jax.random.normal(kv2, (Bm, Lm, d_model), dtype=jnp.float32)
    # The torch MHA adds the unsqueezed mask directly to the scores, so pass an
    # additive mask (0 = keep, -1e9 = drop) to keep the test meaningful.
    keep = (jax.random.uniform(km2, (Bm, Lm, Lm)) > 0.3).astype(jnp.float32)
    keep = keep.at[:, :, 0].set(1.0)
    add_mask = (1.0 - keep) * -1000000000.0

    y, attn_m, _ = multi_head_attention(params, xq, xk, xv, add_mask,
                                        n_head=n_head, d_k=d_k, d_v=d_v)
    y = jax.block_until_ready(y)
    y_ref, attn_ref_m, _ = _mha_reference(params, xq, xk, xv, add_mask,
                                          n_head=n_head, d_k=d_k, d_v=d_v)
    assert jnp.allclose(y, y_ref, atol=1e-4, rtol=1e-4), "mha output mismatch"
    assert jnp.allclose(attn_m, attn_ref_m, atol=2e-5, rtol=2e-5), "mha attn mismatch"

    print("KERNEL_OK")
</pallas_src>

<mosaic_0001>
module attributes {stable_mosaic.version = 11 : i64} {
  func.func @_sdpa_kernel(%arg0: i32, %arg1: i32, %arg2: i32, %arg3: memref<1x1x8x32xf32, #tpu.memory_space<vmem>>, %arg4: memref<1x1x8x32xf32, #tpu.memory_space<vmem>>, %arg5: memref<1x1x8x32xf32, #tpu.memory_space<vmem>>, %arg6: memref<1x1x8x8xf32, #tpu.memory_space<vmem>>, %arg7: memref<1x1x8x32xf32, #tpu.memory_space<vmem>>, %arg8: memref<1x1x8x8xf32, #tpu.memory_space<vmem>>) attributes {dimension_semantics = [#tpu.dimension_semantics<parallel>, #tpu.dimension_semantics<parallel>, #tpu.dimension_semantics<parallel>], iteration_bounds = array<i64: 2, 4, 1>, scalar_prefetch = 0 : i64, scratch_operands = 0 : i64, tpu.core_type = #tpu.core_type<tc>, window_params = [{transform_indices = @transform_0, window_bounds = array<i64: 1, 1, 8, 32>}, {transform_indices = @transform_1, window_bounds = array<i64: 1, 1, 8, 32>}, {transform_indices = @transform_2, window_bounds = array<i64: 1, 1, 8, 32>}, {transform_indices = @transform_3, window_bounds = array<i64: 1, 1, 8, 8>}, {transform_indices = @transform_4, window_bounds = array<i64: 1, 1, 8, 32>}, {transform_indices = @transform_5, window_bounds = array<i64: 1, 1, 8, 8>}]} {
    %c0 = arith.constant 0 : index
    %c0_0 = arith.constant 0 : index
    %c0_1 = arith.constant 0 : index
    %c0_2 = arith.constant 0 : index
    %0 = vector.load %arg3[%c0, %c0_0, %c0_1, %c0_2] : memref<1x1x8x32xf32, #tpu.memory_space<vmem>>, vector<1x1x8x32xf32>
    %1 = vector.shape_cast %0 : vector<1x1x8x32xf32> to vector<8x32xf32>
    %c0_3 = arith.constant 0 : index
    %c0_4 = arith.constant 0 : index
    %c0_5 = arith.constant 0 : index
    %c0_6 = arith.constant 0 : index
    %2 = vector.load %arg4[%c0_3, %c0_4, %c0_5, %c0_6] : memref<1x1x8x32xf32, #tpu.memory_space<vmem>>, vector<1x1x8x32xf32>
    %3 = vector.shape_cast %2 : vector<1x1x8x32xf32> to vector<8x32xf32>
    %c0_7 = arith.constant 0 : index
    %c0_8 = arith.constant 0 : index
    %c0_9 = arith.constant 0 : index
    %c0_10 = arith.constant 0 : index
    %4 = vector.load %arg5[%c0_7, %c0_8, %c0_9, %c0_10] : memref<1x1x8x32xf32, #tpu.memory_space<vmem>>, vector<1x1x8x32xf32>
    %5 = vector.shape_cast %4 : vector<1x1x8x32xf32> to vector<8x32xf32>
    %cst = arith.constant dense<0.000000e+00> : vector<8x8xf32>
    %6 = tpu.matmul %1, %3, %cst {dimension_numbers = #tpu.dot_dimension_numbers<[1], [1], [0], [0], [0, 0, 1, 0], [], []>} : vector<8x32xf32>, vector<8x32xf32>, vector<8x8xf32> -> vector<8x8xf32>
    %cst_11 = arith.constant 0.176776692 : f32
    %7 = vector.broadcast %cst_11 : f32 to vector<8x8xf32>
    %8 = arith.mulf %6, %7 : vector<8x8xf32>
    %c0_12 = arith.constant 0 : index
    %c0_13 = arith.constant 0 : index
    %c0_14 = arith.constant 0 : index
    %c0_15 = arith.constant 0 : index
    %9 = vector.load %arg6[%c0_12, %c0_13, %c0_14, %c0_15] : memref<1x1x8x8xf32, #tpu.memory_space<vmem>>, vector<1x1x8x8xf32>
    %10 = vector.shape_cast %9 : vector<1x1x8x8xf32> to vector<8x8xf32>
    %cst_16 = arith.constant 1.000000e+00 : f32
    %11 = vector.broadcast %cst_16 : f32 to vector<8x8xf32>
    %12 = arith.subf %11, %10 : vector<8x8xf32>
    %cst_17 = arith.constant -1.000000e+09 : f32
    %13 = vector.broadcast %cst_17 : f32 to vector<8x8xf32>
    %14 = arith.mulf %12, %13 : vector<8x8xf32>
    %15 = arith.addf %8, %14 : vector<8x8xf32>
    %cst_18 = arith.constant dense<0xFF800000> : vector<8xf32>
    %16 = vector.multi_reduction <maximumf>, %15, %cst_18 [1] : vector<8x8xf32> to vector<8xf32>
    %17 = vector.shape_cast %16 : vector<8xf32> to vector<8x1xf32>
    %18 = vector.broadcast %17 : vector<8x1xf32> to vector<8x8xf32>
    %19 = arith.subf %15, %18 : vector<8x8xf32>
    %20 = math.exp %19 : vector<8x8xf32>
    %cst_19 = arith.constant dense<0.000000e+00> : vector<8xf32>
    %21 = vector.multi_reduction <add>, %20, %cst_19 [1] : vector<8x8xf32> to vector<8xf32>
    %22 = vector.shape_cast %21 : vector<8xf32> to vector<8x1xf32>
    %23 = tpu.reciprocal %22 {approx = true} : vector<8x1xf32> -> vector<8x1xf32>
    %24 = arith.mulf %22, %23 : vector<8x1xf32>
    %cst_20 = arith.constant 2.000000e+00 : f32
    %25 = vector.broadcast %cst_20 : f32 to vector<8x1xf32>
    %26 = arith.subf %25, %24 : vector<8x1xf32>
    %27 = arith.mulf %23, %26 : vector<8x1xf32>
    %28 = vector.broadcast %27 : vector<8x1xf32> to vector<8x8xf32>
    %29 = arith.mulf %20, %28 : vector<8x8xf32>
    %c0_21 = arith.constant 0 : index
    %c0_22 = arith.constant 0 : index
    %c0_23 = arith.constant 0 : index
    %c0_24 = arith.constant 0 : index
    %30 = vector.load %arg8[%c0_21, %c0_22, %c0_23, %c0_24] : memref<1x1x8x8xf32, #tpu.memory_space<vmem>>, vector<1x1x8x8xf32>
    %31 = vector.shape_cast %30 : vector<1x1x8x8xf32> to vector<8x8xf32>
    %32 = vector.shape_cast %29 : vector<8x8xf32> to vector<1x1x8x8xf32>
    tpu.vector_store %arg8[%c0_21, %c0_22, %c0_23, %c0_24], %32 {strides = array<i32>} : memref<1x1x8x8xf32, #tpu.memory_space<vmem>>, vector<1x1x8x8xf32>,
    %cst_25 = arith.constant dense<0.000000e+00> : vector<8x32xf32>
    %33 = tpu.matmul %29, %5, %cst_25 {dimension_numbers = #tpu.dot_dimension_numbers<[1], [0], [0], [1], [0, 0, 1, 1], [], []>} : vector<8x8xf32>, vector<8x32xf32>, vector<8x32xf32> -> vector<8x32xf32>
    %c0_26 = arith.constant 0 : index
    %c0_27 = arith.constant 0 : index
    %c0_28 = arith.constant 0 : index
    %c0_29 = arith.constant 0 : index
    %34 = vector.load %arg7[%c0_26, %c0_27, %c0_28, %c0_29] : memref<1x1x8x32xf32, #tpu.memory_space<vmem>>, vector<1x1x8x32xf32>
    %35 = vector.shape_cast %34 : vector<1x1x8x32xf32> to vector<8x32xf32>
    %36 = vector.shape_cast %33 : vector<8x32xf32> to vector<1x1x8x32xf32>
    tpu.vector_store %arg7[%c0_26, %c0_27, %c0_28, %c0_29], %36 {strides = array<i32>} : memref<1x1x8x32xf32, #tpu.memory_space<vmem>>, vector<1x1x8x32xf32>,
    return
  }
  func.func @transform_0(%arg0: i32, %arg1: i32, %arg2: i32) -> (i32, i32, i32, i32) {
    %c0_i32 = arith.constant 0 : i32
    %c0_i32_0 = arith.constant 0 : i32
    return %arg0, %arg1, %arg2, %c0_i32 : i32, i32, i32, i32
  }
  func.func @transform_1(%arg0: i32, %arg1: i32, %arg2: i32) -> (i32, i32, i32, i32) {
    %c0_i32 = arith.constant 0 : i32
    %c0_i32_0 = arith.constant 0 : i32
    %c0_i32_1 = arith.constant 0 : i32
    return %arg0, %arg1, %c0_i32, %c0_i32_0 : i32, i32, i32, i32
  }
  func.func @transform_2(%arg0: i32, %arg1: i32, %arg2: i32) -> (i32, i32, i32, i32) {
    %c0_i32 = arith.constant 0 : i32
    %c0_i32_0 = arith.constant 0 : i32
    %c0_i32_1 = arith.constant 0 : i32
    return %arg0, %arg1, %c0_i32, %c0_i32_0 : i32, i32, i32, i32
  }
  func.func @transform_3(%arg0: i32, %arg1: i32, %arg2: i32) -> (i32, i32, i32, i32) {
    %c0_i32 = arith.constant 0 : i32
    %c0_i32_0 = arith.constant 0 : i32
    %c0_i32_1 = arith.constant 0 : i32
    return %arg0, %c0_i32, %arg2, %c0_i32_0 : i32, i32, i32, i32
  }
  func.func @transform_4(%arg0: i32, %arg1: i32, %arg2: i32) -> (i32, i32, i32, i32) {
    %c0_i32 = arith.constant 0 : i32
    %c0_i32_0 = arith.constant 0 : i32
    return %arg0, %arg1, %arg2, %c0_i32 : i32, i32, i32, i32
  }
  func.func @transform_5(%arg0: i32, %arg1: i32, %arg2: i32) -> (i32, i32, i32, i32) {
    %c0_i32 = arith.constant 0 : i32
    %c0_i32_0 = arith.constant 0 : i32
    return %arg0, %arg1, %arg2, %c0_i32 : i32, i32, i32, i32
  }
}

</mosaic_0001>

<llo_original>
// kernel: tpu_custom_call.1
$region0: #{tpu_custom_call.1}
  #allocation0 [shape = 'u32[]', space=smem, size = 0x4, offset = 0x4, fixed_abs, tag = 'smem constant byte address 0x4 - core index']
  #allocation1 [shape = 'u32[144,128]{1,0:T(1,128)}', space=vmem, size = 0x12000, scoped, tag = 'internal scratch']
  %s0 = inlined_call_operand.hbm [shape: f32[2,4,8,32], index: 0, kind: input, shape index: {}]
  %s1 = inlined_call_operand.hbm [shape: f32[2,4,8,32], index: 1, kind: input, shape index: {}]
  %s2 = inlined_call_operand.hbm [shape: f32[2,4,8,32], index: 2, kind: input, shape index: {}]
  %s3 = inlined_call_operand.hbm [shape: f32[2,1,8,8], index: 3, kind: input, shape index: {}]
  %s4 = inlined_call_operand.hbm [shape: f32[2,4,8,32], index: 4, kind: output, shape index: {0}]
  %s5 = inlined_call_operand.hbm [shape: f32[2,4,8,8], index: 5, kind: output, shape index: {1}]
  %6 = xla_tuple %s4, %s5
  %s7 = sld [smem:[#allocation0]]
  $region73: #{tpu_custom_call.1} parent=0
    _
  %s9 = ssub.s32 1, %s7
  %s10 = scalar_select 0, %s9, %s7
  $region1: #{tpu_custom_call.1} parent=0
    #allocation2 [shape = 'u8[8192]{0}', space=vmem, size = 0x2000, scoped, tag = 'input window, operand 0']
    #allocation3 [shape = 's32[2]{0}', space=sflag, size = 0x8, scoped, tag = 'scoped memory for tpu_custom_call.1']
    #allocation4 [shape = 's32[2]{0}', space=sflag, size = 0x8, scoped, tag = 'scoped memory for tpu_custom_call.1']
    #allocation5 [shape = 'u8[8192]{0}', space=vmem, size = 0x2000, scoped, tag = 'input window, operand 1']
    #allocation6 [shape = 's32[2]{0}', space=sflag, size = 0x8, scoped, tag = 'scoped memory for tpu_custom_call.1']
    #allocation7 [shape = 'u8[8192]{0}', space=vmem, size = 0x2000, scoped, tag = 'input window, operand 2']
    #allocation8 [shape = 'u8[8192]{0}', space=vmem, size = 0x2000, scoped, tag = 'input window, operand 3']
    #allocation9 [shape = 's32[2]{0}', space=sflag, size = 0x8, scoped, tag = 'scoped memory for tpu_custom_call.1']
    #allocation10 [shape = 'u8[8192]{0}', space=vmem, size = 0x2000, scoped, tag = 'output window, operand 0']
    #allocation11 [shape = 'u8[8192]{0}', space=vmem, size = 0x2000, scoped, tag = 'output window, operand 1']
    #allocation12 [shape = 's32[2]{0}', space=sflag, size = 0x8, scoped, tag = 'scoped memory for tpu_custom_call.1']
    %11 = vsyncpa [#allocation3], 0
    %s12 = scalar_lea.sflag [#allocation3], 1
    %13 = vsyncpa %s12, 0
    %14 = vsyncpa [#allocation6], 0
    %s15 = scalar_lea.sflag [#allocation6], 1
    %16 = vsyncpa %s15, 0
    %17 = vsyncpa [#allocation9], 0
    %s18 = scalar_lea.sflag [#allocation9], 1
    %19 = vsyncpa %s18, 0
    %20 = vsyncpa [#allocation4], 0
    %s21 = scalar_lea.sflag [#allocation4], 1
    %22 = vsyncpa %s21, 0
    %23 = vsyncpa [#allocation12], 0
    %s24 = scalar_lea.sflag [#allocation12], 1
    %25 = vsyncpa %s24, 0
    loop: start=0, step=1, limit=10
    $region2: #{tpu_custom_call.1} parent=1 // loop_pre_header
      _
    $region3: #{tpu_custom_call.1} parent=1 // loop_header
      %s27 = sphi 0, %s31
      %p28 = scmp.ge.s32.totalorder %s27, 10
      %s34 = sphi 0, %s53
      %s35 = sphi 0, %s49
      %s36 = sphi 0, %s45
      %s37 = sphi 0, %s34
      %s38 = sphi 0, %s35
      %s39 = sphi 0, %s36
      %s40 = sphi 0, %s37
      %s41 = sphi 0, %s38
      %s42 = sphi 0, %s39
      %s60 = sphi 0, %s62
      %s63 = sphi 0, %s60
      %s64 = sphi 0, %s63
      %s80 = sphi 0, %s64
      %s88 = sphi 0, %s90
      %s91 = sphi 0, %s88
      %s92 = sphi 0, %s91
      %s108 = sphi 0, %s92
      %s116 = sphi 0, %s118
      %s119 = sphi 0, %s116
      %s120 = sphi 0, %s119
      %s136 = sphi 0, %s120
      %s144 = sphi 0, %s146
      %s147 = sphi 0, %s144
      %s148 = sphi 0, %s147
      %s164 = sphi 0, %s148
      %s174 = sphi 0, %s176
      %s177 = sphi 0, %s174
      %s178 = sphi 0, %s177
      %s194 = sphi 0, %s178
      %s204 = sphi 0, %s206
      %s207 = sphi 0, %s204
      %s208 = sphi 0, %s207
      %s224 = sphi 0, %s208
    $region4: #{tpu_custom_call.1} parent=1 // loop_header_branch
      %30 = sbr.rel (%p28) target = $region8
    $region5: #{tpu_custom_call.1} parent=1 // loop_body
      %s32 = ssub.s32 %s27, 1
      %s33 = ssub.s32 %s27, 2
      %s43 = sadd.s32 1, %s36
      %p44 = scmp.ge.s32.totalorder %s43, 1
      %s45 = scalar_select %p44, 0, %s43
      %s46 = sadd.s32 1, %s35
      %s47 = scalar_select %p44, %s46, %s35
      %p48 = scmp.ge.s32.totalorder %s47, 4
      %s49 = scalar_select %p48, 0, %s47
      %s50 = sadd.s32 1, %s34
      %s51 = scalar_select %p48, %s50, %s34
      %p52 = scmp.ge.s32.totalorder %s51, 2
      %s53 = scalar_select %p52, 0, %s51
      %s54 = ssub.s32 %s34, %s53
      %s55 = ssub.s32 %s35, %s49
      %s56 = sor.u32 %s54, %s55
      %s57 = ssub.s32 %s36, %s45
      %s58 = sor.u32 %s56, %s57
      %p59 = scmp.eq.s32.totalorder %s58, 0
      %s61 = sadd.s32 %s60, 1
      %s62 = scalar_select %p59, %s60, %s61
      %p65 = pneg %p59
      %p66 = scmp.eq.s32.totalorder %s27, 7
      %p67 = por %p65, %p66
      %p68 = scmp.ne.s32.totalorder %s60, %s63
      %p69 = scmp.eq.s32.totalorder %s27, 0
      %p70 = por %p68, %p69
      %p71 = scmp.ne.s32.totalorder %s60, %s63
      %p72 = scmp.eq.s32.totalorder %s32, 7
      %p73 = por %p71, %p72
      %p74 = scmp.ne.s32.totalorder %s63, %s64
      %p75 = scmp.eq.s32.totalorder %s32, 0
      %p76 = por %p74, %p75
      %p77 = scmp.ne.s32.totalorder %s63, %s64
      %p78 = scmp.eq.s32.totalorder %s33, 7
      %p79 = por %p77, %p78
      %p81 = scmp.ne.s32.totalorder %s64, %s80
      %p82 = scmp.eq.s32.totalorder %s33, 0
      %p83 = por %p81, %p82
      %s84 = ssub.s32 %s34, %s53
      %s85 = ssub.s32 %s35, %s49
      %s86 = sor.u32 %s84, %s85
      %p87 = scmp.eq.s32.totalorder %s86, 0
      %s89 = sadd.s32 %s88, 1
      %s90 = scalar_select %p87, %s88, %s89
      %p93 = pneg %p87
      %p94 = scmp.eq.s32.totalorder %s27, 7
      %p95 = por %p93, %p94
      %p96 = scmp.ne.s32.totalorder %s88, %s91
      %p97 = scmp.eq.s32.totalorder %s27, 0
      %p98 = por %p96, %p97
      %p99 = scmp.ne.s32.totalorder %s88, %s91
      %p100 = scmp.eq.s32.totalorder %s32, 7
      %p101 = por %p99, %p100
      %p102 = scmp.ne.s32.totalorder %s91, %s92
      %p103 = scmp.eq.s32.totalorder %s32, 0
      %p104 = por %p102, %p103
      %p105 = scmp.ne.s32.totalorder %s91, %s92
      %p106 = scmp.eq.s32.totalorder %s33, 7
      %p107 = por %p105, %p106
      %p109 = scmp.ne.s32.totalorder %s92, %s108
      %p110 = scmp.eq.s32.totalorder %s33, 0
      %p111 = por %p109, %p110
      %s112 = ssub.s32 %s34, %s53
      %s113 = ssub.s32 %s35, %s49
      %s114 = sor.u32 %s112, %s113
      %p115 = scmp.eq.s32.totalorder %s114, 0
      %s117 = sadd.s32 %s116, 1
      %s118 = scalar_select %p115, %s116, %s117
      %p121 = pneg %p115
      %p122 = scmp.eq.s32.totalorder %s27, 7
      %p123 = por %p121, %p122
      %p124 = scmp.ne.s32.totalorder %s116, %s119
      %p125 = scmp.eq.s32.totalorder %s27, 0
      %p126 = por %p124, %p125
      %p127 = scmp.ne.s32.totalorder %s116, %s119
      %p128 = scmp.eq.s32.totalorder %s32, 7
      %p129 = por %p127, %p128
      %p130 = scmp.ne.s32.totalorder %s119, %s120
      %p131 = scmp.eq.s32.totalorder %s32, 0
      %p132 = por %p130, %p131
      %p133 = scmp.ne.s32.totalorder %s119, %s120
      %p134 = scmp.eq.s32.totalorder %s33, 7
      %p135 = por %p133, %p134
      %p137 = scmp.ne.s32.totalorder %s120, %s136
      %p138 = scmp.eq.s32.totalorder %s33, 0
      %p139 = por %p137, %p138
      %s140 = ssub.s32 %s34, %s53
      %s141 = ssub.s32 %s36, %s45
      %s142 = sor.u32 %s140, %s141
      %p143 = scmp.eq.s32.totalorder %s142, 0
      %s145 = sadd.s32 %s144, 1
      %s146 = scalar_select %p143, %s144, %s145
      %p149 = pneg %p143
      %p150 = scmp.eq.s32.totalorder %s27, 7
      %p151 = por %p149, %p150
      %p152 = scmp.ne.s32.totalorder %s144, %s147
      %p153 = scmp.eq.s32.totalorder %s27, 0
      %p154 = por %p152, %p153
      %p155 = scmp.ne.s32.totalorder %s144, %s147
      %p156 = scmp.eq.s32.totalorder %s32, 7
      %p157 = por %p155, %p156
      %p158 = scmp.ne.s32.totalorder %s147, %s148
      %p159 = scmp.eq.s32.totalorder %s32, 0
      %p160 = por %p158, %p159
      %p161 = scmp.ne.s32.totalorder %s147, %s148
      %p162 = scmp.eq.s32.totalorder %s33, 7
      %p163 = por %p161, %p162
      %p165 = scmp.ne.s32.totalorder %s148, %s164
      %p166 = scmp.eq.s32.totalorder %s33, 0
      %p167 = por %p165, %p166
      %s168 = ssub.s32 %s34, %s53
      %s169 = ssub.s32 %s35, %s49
      %s170 = sor.u32 %s168, %s169
      %s171 = ssub.s32 %s36, %s45
      %s172 = sor.u32 %s170, %s171
      %p173 = scmp.eq.s32.totalorder %s172, 0
      %s175 = sadd.s32 %s174, 1
      %s176 = scalar_select %p173, %s174, %s175
      %p179 = pneg %p173
      %p180 = scmp.eq.s32.totalorder %s27, 7
      %p181 = por %p179, %p180
      %p182 = scmp.ne.s32.totalorder %s174, %s177
      %p183 = scmp.eq.s32.totalorder %s27, 0
      %p184 = por %p182, %p183
      %p185 = scmp.ne.s32.totalorder %s174, %s177
      %p186 = scmp.eq.s32.totalorder %s32, 7
      %p187 = por %p185, %p186
      %p188 = scmp.ne.s32.totalorder %s177, %s178
      %p189 = scmp.eq.s32.totalorder %s32, 0
      %p190 = por %p188, %p189
      %p191 = scmp.ne.s32.totalorder %s177, %s178
      %p192 = scmp.eq.s32.totalorder %s33, 7
      %p193 = por %p191, %p192
      %p195 = scmp.ne.s32.totalorder %s178, %s194
      %p196 = scmp.eq.s32.totalorder %s33, 0
      %p197 = por %p195, %p196
      %s198 = ssub.s32 %s34, %s53
      %s199 = ssub.s32 %s35, %s49
      %s200 = sor.u32 %s198, %s199
      %s201 = ssub.s32 %s36, %s45
      %s202 = sor.u32 %s200, %s201
      %p203 = scmp.eq.s32.totalorder %s202, 0
      %s205 = sadd.s32 %s204, 1
      %s206 = scalar_select %p203, %s204, %s205
      %p209 = pneg %p203
      %p210 = scmp.eq.s32.totalorder %s27, 7
      %p211 = por %p209, %p210
      %p212 = scmp.ne.s32.totalorder %s204, %s207
      %p213 = scmp.eq.s32.totalorder %s27, 0
      %p214 = por %p212, %p213
      %p215 = scmp.ne.s32.totalorder %s204, %s207
      %p216 = scmp.eq.s32.totalorder %s32, 7
      %p217 = por %p215, %p216
      %p218 = scmp.ne.s32.totalorder %s207, %s208
      %p219 = scmp.eq.s32.totalorder %s32, 0
      %p220 = por %p218, %p219
      %p221 = scmp.ne.s32.totalorder %s207, %s208
      %p222 = scmp.eq.s32.totalorder %s33, 7
      %p223 = por %p221, %p222
      %p225 = scmp.ne.s32.totalorder %s208, %s224
      %p226 = scmp.eq.s32.totalorder %s33, 0
      %p227 = por %p225, %p226
      %p228 = scmp.le.s32.totalorder 1, %s27
      %p229 = scmp.lt.s32.totalorder %s27, 9
      %p230 = pnand %p228, %p229
      %p231 = pneg %p230
      // Predicated region
      $region9: #{tpu_custom_call.1} parent=5 // pred_check
        _
      $region10: #{tpu_custom_call.1} parent=5 // pred_check_branch
        %233 = sbr.rel (%p230) target = $region12
      $region11: #{tpu_custom_call.1} parent=5 // pred_region
        %s234 = ssub.s32 %s27, 1
      $region12: #{tpu_custom_call.1} parent=5 // pred_fallthru
        _
      %p235 = scmp.lt.s32.totalorder %s27, 8
      // Predicated region
      $region13: #{tpu_custom_call.1} parent=5 // pred_check
        %p236 = pneg %p235
      $region14: #{tpu_custom_call.1} parent=5 // pred_check_branch
        %238 = sbr.rel (%p236) target = $region16
      $region15: #{tpu_custom_call.1} parent=5 // pred_region
        // Predicated region
        $region17: #{tpu_custom_call.1} parent=15 // pred_check
          %p239 = pneg %p70
        $region18: #{tpu_custom_call.1} parent=15 // pred_check_branch
          %241 = sbr.rel (%p239) target = $region20
        $region19: #{tpu_custom_call.1} parent=15 // pred_region
          %s242 = sand.u32 %s60, 1
          %s243 = scalar_lea.sflag [#allocation3], %s242
          %s244 = sand.u32 %s60, 1
          %s245 = smul.addr %s244, 8
          %s246 = scalar_lea.vmem [#allocation2], %s245
          %s248 = ssub.s32 128, 128
          %249 = vsyncadd %s243, %s248
          %s250 = sadd.s32 %s36, %s35
          %s251 = smul.addr %s34, 4
          %s252 = sadd.s32 %s250, %s251
          %s253 = smul.addr %s252, 128
          %s254 = scalar_lea.hbm %s0, %s253
          %s256 = sshll.u32 %s246, 4
          %s257 = int_to_ptr.vmem [resolvable:$true] %s256
          %259 = dma.hbm_to_vmem [thread:$0]  %s254, 128, %s257, %s243
        $region20: #{tpu_custom_call.1} parent=15 // pred_fallthru
          _
        // Predicated region
        $region21: #{tpu_custom_call.1} parent=15 // pred_check
          %p260 = pneg %p98
        $region22: #{tpu_custom_call.1} parent=15 // pred_check_branch
          %262 = sbr.rel (%p260) target = $region24
        $region23: #{tpu_custom_call.1} parent=15 // pred_region
          %s263 = sand.u32 %s27, 1
          %s264 = scalar_lea.sflag [#allocation6], %s263
          %s265 = sand.u32 %s88, 1
          %s266 = smul.addr %s265, 8
          %s267 = scalar_lea.vmem [#allocation5], %s266
          %s269 = ssub.s32 128, 128
          %270 = vsyncadd %s264, %s269
          %s271 = smul.addr %s34, 4
          %s272 = sadd.s32 %s35, %s271
          %s273 = smul.addr %s272, 128
          %s274 = scalar_lea.hbm %s1, %s273
          %s276 = sshll.u32 %s267, 4
          %s277 = int_to_ptr.vmem [resolvable:$true] %s276
          %279 = dma.hbm_to_vmem [thread:$0]  %s274, 128, %s277, %s264
        $region24: #{tpu_custom_call.1} parent=15 // pred_fallthru
          _
        // Predicated region
        $region25: #{tpu_custom_call.1} parent=15 // pred_check
          %p280 = pneg %p126
        $region26: #{tpu_custom_call.1} parent=15 // pred_check_branch
          %282 = sbr.rel (%p280) target = $region28
        $region27: #{tpu_custom_call.1} parent=15 // pred_region
          %s283 = sand.u32 %s27, 1
          %s284 = scalar_lea.sflag [#allocation6], %s283
          %s285 = sand.u32 %s116, 1
          %s286 = smul.addr %s285, 8
          %s287 = scalar_lea.vmem [#allocation7], %s286
          %s289 = ssub.s32 128, 128
          %290 = vsyncadd %s284, %s289
          %s291 = smul.addr %s34, 4
          %s292 = sadd.s32 %s35, %s291
          %s293 = smul.addr %s292, 128
          %s294 = scalar_lea.hbm %s2, %s293
          %s296 = sshll.u32 %s287, 4
          %s297 = int_to_ptr.vmem [resolvable:$true] %s296
          %299 = dma.hbm_to_vmem [thread:$0]  %s294, 128, %s297, %s284
        $region28: #{tpu_custom_call.1} parent=15 // pred_fallthru
          _
        // Predicated region
        $region29: #{tpu_custom_call.1} parent=15 // pred_check
          %p300 = pneg %p154
        $region30: #{tpu_custom_call.1} parent=15 // pred_check_branch
          %302 = sbr.rel (%p300) target = $region32
        $region31: #{tpu_custom_call.1} parent=15 // pred_region
          %s303 = sand.u32 %s144, 1
          %s304 = scalar_lea.sflag [#allocation9], %s303
          %s305 = sand.u32 %s144, 1
          %s306 = smul.addr %s305, 8
          %s307 = scalar_lea.vmem [#allocation8], %s306
          %s309 = ssub.s32 128, 128
          %310 = vsyncadd %s304, %s309
          %s311 = sadd.s32 %s36, %s34
          %s312 = smul.addr %s311, 128
          %s313 = scalar_lea.hbm %s3, %s312
          %s315 = sshll.u32 %s307, 4
          %s316 = int_to_ptr.vmem [resolvable:$true] %s315
          %318 = dma.hbm_to_vmem [thread:$0]  %s313, 128, %s316, %s304
        $region32: #{tpu_custom_call.1} parent=15 // pred_fallthru
          _
      $region16: #{tpu_custom_call.1} parent=5 // pred_fallthru
        _
      %p319 = scmp.le.s32.totalorder 1, %s27
      %p320 = scmp.lt.s32.totalorder %s27, 9
      %p321 = pnand %p319, %p320
      %p322 = pneg %p321
      // Predicated region
      $region33: #{tpu_custom_call.1} parent=5 // pred_check
        _
      $region34: #{tpu_custom_call.1} parent=5 // pred_check_branch
        %324 = sbr.rel (%p321) target = $region36
      $region35: #{tpu_custom_call.1} parent=5 // pred_region
        %s325 = ssub.s32 %s27, 1
        %s326 = sand.u32 %s63, 1
        %s327 = scalar_lea.sflag [#allocation3], %s326
        %s328 = sand.u32 %s63, 1
        %s329 = smul.addr %s328, 8
        %s330 = scalar_lea.vmem [#allocation2], %s329
        // Predicated region
        $region37: #{tpu_custom_call.1} parent=35 // pred_check
          %p331 = pneg %p76
        $region38: #{tpu_custom_call.1} parent=35 // pred_check_branch
          %333 = sbr.rel (%p331) target = $region40
        $region39: #{tpu_custom_call.1} parent=35 // pred_region
          %334 = dma.done %s327, 128
        $region40: #{tpu_custom_call.1} parent=35 // pred_fallthru
          _
        %s335 = sand.u32 %s32, 1
        %s336 = scalar_lea.sflag [#allocation6], %s335
        %s337 = sand.u32 %s91, 1
        %s338 = smul.addr %s337, 8
        %s339 = scalar_lea.vmem [#allocation5], %s338
        // Predicated region
        $region41: #{tpu_custom_call.1} parent=35 // pred_check
          %p340 = pneg %p104
        $region42: #{tpu_custom_call.1} parent=35 // pred_check_branch
          %342 = sbr.rel (%p340) target = $region44
        $region43: #{tpu_custom_call.1} parent=35 // pred_region
          %343 = dma.done %s336, 128
        $region44: #{tpu_custom_call.1} parent=35 // pred_fallthru
          _
        %s344 = sand.u32 %s32, 1
        %s345 = scalar_lea.sflag [#allocation6], %s344
        %s346 = sand.u32 %s119, 1
        %s347 = smul.addr %s346, 8
        %s348 = scalar_lea.vmem [#allocation7], %s347
        // Predicated region
        $region45: #{tpu_custom_call.1} parent=35 // pred_check
          %p349 = pneg %p132
        $region46: #{tpu_custom_call.1} parent=35 // pred_check_branch
          %351 = sbr.rel (%p349) target = $region48
        $region47: #{tpu_custom_call.1} parent=35 // pred_region
          %352 = dma.done %s345, 128
        $region48: #{tpu_custom_call.1} parent=35 // pred_fallthru
          _
        %s353 = sand.u32 %s147, 1
        %s354 = scalar_lea.sflag [#allocation9], %s353
        %s355 = sand.u32 %s147, 1
        %s356 = smul.addr %s355, 8
        %s357 = scalar_lea.vmem [#allocation8], %s356
        // Predicated region
        $region49: #{tpu_custom_call.1} parent=35 // pred_check
          %p358 = pneg %p160
        $region50: #{tpu_custom_call.1} parent=35 // pred_check_branch
          %360 = sbr.rel (%p358) target = $region52
        $region51: #{tpu_custom_call.1} parent=35 // pred_region
          %361 = dma.done %s354, 128
        $region52: #{tpu_custom_call.1} parent=35 // pred_fallthru
          _
        %s362 = sand.u32 %s63, 1
        %s363 = scalar_lea.sflag [#allocation3], %s362
        %s364 = sand.u32 %s63, 1
        %s365 = smul.addr %s364, 8
        %s366 = scalar_lea.vmem [#allocation2], %s365
        %p367 = pneg %p76
        %p368 = pneg %p73
        %s369 = sand.u32 %s32, 1
        %s370 = scalar_lea.sflag [#allocation6], %s369
        %s371 = sand.u32 %s91, 1
        %s372 = smul.addr %s371, 8
        %s373 = scalar_lea.vmem [#allocation5], %s372
        %p374 = pneg %p104
        %p375 = pneg %p101
        %s376 = sand.u32 %s32, 1
        %s377 = scalar_lea.sflag [#allocation6], %s376
        %s378 = sand.u32 %s119, 1
        %s379 = smul.addr %s378, 8
        %s380 = scalar_lea.vmem [#allocation7], %s379
        %p381 = pneg %p132
        %p382 = pneg %p129
        %s383 = sand.u32 %s147, 1
        %s384 = scalar_lea.sflag [#allocation9], %s383
        %s385 = sand.u32 %s147, 1
        %s386 = smul.addr %s385, 8
        %s387 = scalar_lea.vmem [#allocation8], %s386
        %p388 = pneg %p160
        %p389 = pneg %p157
        %p390 = pneg %p190
        %p391 = pneg %p187
        %s392 = sand.u32 %s177, 1
        %s393 = scalar_lea.sflag [#allocation4], %s392
        %s394 = sand.u32 %s177, 1
        %s395 = smul.addr %s394, 8
        %s396 = scalar_lea.vmem [#allocation10], %s395
        %p397 = pneg %p220
        %p398 = pneg %p217
        %s399 = sand.u32 %s207, 1
        %s400 = scalar_lea.sflag [#allocation12], %s399
        %s401 = sand.u32 %s207, 1
        %s402 = smul.addr %s401, 8
        %s403 = scalar_lea.vmem [#allocation11], %s402
        %v404 = vld [vmem:[%s330] sm:$0xff]
        %v405 = vld [vmem:[%s339] sm:$0xff]
        %v406 = vld [vmem:[%s348] sm:$0xff]
        %vm407 = vcmask 261120
        %v409 = vsel %vm407, %v404, 0
        %v412 = vsel %vm407, %v405, 0
        %414 = vmatprep.subr.mxu0 0.0
        %415 = vmatpush1.xpose.msra.mxu0 0.0
        %416 = vmatprep.subr.mxu0 0.0
        %417 = vmatpush1.xpose.msra.mxu0 0.0
        %418 = vmatprep.subr.mxu0 0.0
        %419 = vmatpush1.xpose.msra.mxu0 0.0
        %420 = vmatprep.subr.mxu0 0.0
        %421 = vmatpush1.xpose.msra.mxu0 0.0
        %422 = vmatprep.subr.mxu0 0.0
        %423 = vmatpush1.xpose.msra.mxu0 0.0
        %424 = vmatprep.subr.mxu0 0.0
        %425 = vmatpush1.xpose.msra.mxu0 0.0
        %426 = vmatprep.subr.mxu0 0.0
        %427 = vmatpush1.xpose.msra.mxu0 0.0
        %428 = vmatprep.subr.mxu0 0.0
        %429 = vmatpush1.xpose.msra.mxu0 0.0
        %430 = vmatprep.subr.mxu0 0.0
        %431 = vmatpush1.xpose.msra.mxu0 0.0
        %432 = vmatprep.subr.mxu0 0.0
        %433 = vmatpush1.xpose.msra.mxu0 0.0
        %434 = vmatprep.subr.mxu0 0.0
        %435 = vmatpush1.xpose.msra.mxu0 0.0
        %436 = vmatprep.subr.mxu0 0.0
        %437 = vmatpush1.xpose.msra.mxu0 0.0
        %438 = vmatprep.subr.mxu0 0.0
        %439 = vmatpush1.xpose.msra.mxu0 0.0
        %440 = vmatprep.subr.mxu0 0.0
        %441 = vmatpush1.xpose.msra.mxu0 0.0
        %442 = vmatprep.subr.mxu0 0.0
        %443 = vmatpush1.xpose.msra.mxu0 0.0
        %444 = vmatprep.subr.mxu0 0.0
        %445 = vmatpush1.xpose.msra.mxu0 %v412
        %446 = vmatprep.subr.mxu0 0.0
        %447 = vmatpush2.xpose.msra.mxu0 0.0
        %448 = vmatprep.subr.mxu0 0.0
        %449 = vmatpush2.xpose.msra.mxu0 0.0
        %450 = vmatprep.subr.mxu0 0.0
        %451 = vmatpush2.xpose.msra.mxu0 0.0
        %452 = vmatprep.subr.mxu0 0.0
        %453 = vmatpush2.xpose.msra.mxu0 0.0
        %454 = vmatprep.subr.mxu0 0.0
        %455 = vmatpush2.xpose.msra.mxu0 0.0
        %456 = vmatprep.subr.mxu0 0.0
        %457 = vmatpush2.xpose.msra.mxu0 0.0
        %458 = vmatprep.subr.mxu0 0.0
        %459 = vmatpush2.xpose.msra.mxu0 0.0
        %460 = vmatprep.subr.mxu0 0.0
        %461 = vmatpush2.xpose.msra.mxu0 0.0
        %462 = vmatprep.subr.mxu0 0.0
        %463 = vmatpush2.xpose.msra.mxu0 0.0
        %464 = vmatprep.subr.mxu0 0.0
        %465 = vmatpush2.xpose.msra.mxu0 0.0
        %466 = vmatprep.subr.mxu0 0.0
        %467 = vmatpush2.xpose.msra.mxu0 0.0
        %468 = vmatprep.subr.mxu0 0.0
        %469 = vmatpush2.xpose.msra.mxu0 0.0
        %470 = vmatprep.subr.mxu0 0.0
        %471 = vmatpush2.xpose.msra.mxu0 0.0
        %472 = vmatprep.subr.mxu0 0.0
        %473 = vmatpush2.xpose.msra.mxu0 0.0
        %474 = vmatprep.subr.mxu0 0.0
        %475 = vmatpush2.xpose.msra.mxu0 0.0
        %476 = vmatprep.subr.mxu0 0.0
        %477 = vmatpush2.xpose.msra.mxu0 0.0
        %478 = vmatprep.mubr.f32.mxu0 0.0
        %479 = vmatmul.mubr.f32.gmra.mxu0 %v409
        %v480 = vpop.f32.mrf.mxu0
        %v481 = vadd.f32 0.0, %v480
        %v482 = vpop.f32.mrf.mxu0
        %483 = vdwg.mxu0
        %v484 = vmul.f32 %v481, 0.17677669
        %v485 = vld [vmem:[%s357] sm:$0xff]
        %v486 = vsub.f32 1.0, %v485
        %v487 = vmul.f32 %v486, -1e+09
        %v488 = vadd.f32 %v484, %v487
        %vm489 = vcmask 64512
        %v490 = vsel %vm489, %v488, -inf
        %491 = vmax.xlane.f32.xlu0 %v490
        %v492 = vpop.xlane.xlu0 %491
        %v493 = vsub.f32 %v488, %v492
        %v494 = vmul.f32 %v493, 1.442695
        %v495 = vpow.pop %v494
        %v496 = vsel %vm489, %v495, 0.0
        %497 = vadd.xlane.f32.xlu0 %v496
        %v498 = vpop.xlane.xlu0 %497
        %v499 = vrcp.pop %v498
        %v500 = vmul.f32 %v498, %v499
        %v501 = vsub.f32 2.0, %v500
        %v502 = vmul.f32 %v499, %v501
        %v503 = vmul.f32 %v495, %v502
        %504 = vst.msk [vmem:[%s403] sm:$0xff] %vm489, %v503
        %v506 = vsel %vm489, %v503, 0
        %508 = vmatprep.subr.mxu0 0.0
        %509 = vmatpush1.msra.mxu0 0.0
        %510 = vmatprep.subr.mxu0 0.0
        %511 = vmatpush1.msra.mxu0 0.0
        %512 = vmatprep.subr.mxu0 0.0
        %513 = vmatpush1.msra.mxu0 0.0
        %514 = vmatprep.subr.mxu0 0.0
        %515 = vmatpush1.msra.mxu0 0.0
        %516 = vmatprep.subr.mxu0 0.0
        %517 = vmatpush1.msra.mxu0 0.0
        %518 = vmatprep.subr.mxu0 0.0
        %519 = vmatpush1.msra.mxu0 0.0
        %520 = vmatprep.subr.mxu0 0.0
        %521 = vmatpush1.msra.mxu0 0.0
        %522 = vmatprep.subr.mxu0 0.0
        %523 = vmatpush1.msra.mxu0 0.0
        %524 = vmatprep.subr.mxu0 0.0
        %525 = vmatpush1.msra.mxu0 0.0
        %526 = vmatprep.subr.mxu0 0.0
        %527 = vmatpush1.msra.mxu0 0.0
        %528 = vmatprep.subr.mxu0 0.0
        %529 = vmatpush1.msra.mxu0 0.0
        %530 = vmatprep.subr.mxu0 0.0
        %531 = vmatpush1.msra.mxu0 0.0
        %532 = vmatprep.subr.mxu0 0.0
        %533 = vmatpush1.msra.mxu0 0.0
        %534 = vmatprep.subr.mxu0 0.0
        %535 = vmatpush1.msra.mxu0 0.0
        %536 = vmatprep.subr.mxu0 0.0
        %537 = vmatpush1.msra.mxu0 0.0
        %538 = vmatprep.subr.mxu0 0.0
        %539 = vmatpush1.msra.mxu0 %v406
        %540 = vmatprep.subr.mxu0 0.0
        %541 = vmatpush2.msra.mxu0 0.0
        %542 = vmatprep.subr.mxu0 0.0
        %543 = vmatpush2.msra.mxu0 0.0
        %544 = vmatprep.subr.mxu0 0.0
        %545 = vmatpush2.msra.mxu0 0.0
        %546 = vmatprep.subr.mxu0 0.0
        %547 = vmatpush2.msra.mxu0 0.0
        %548 = vmatprep.subr.mxu0 0.0
        %549 = vmatpush2.msra.mxu0 0.0
        %550 = vmatprep.subr.mxu0 0.0
        %551 = vmatpush2.msra.mxu0 0.0
        %552 = vmatprep.subr.mxu0 0.0
        %553 = vmatpush2.msra.mxu0 0.0
        %554 = vmatprep.subr.mxu0 0.0
        %555 = vmatpush2.msra.mxu0 0.0
        %556 = vmatprep.subr.mxu0 0.0
        %557 = vmatpush2.msra.mxu0 0.0
        %558 = vmatprep.subr.mxu0 0.0
        %559 = vmatpush2.msra.mxu0 0.0
        %560 = vmatprep.subr.mxu0 0.0
        %561 = vmatpush2.msra.mxu0 0.0
        %562 = vmatprep.subr.mxu0 0.0
        %563 = vmatpush2.msra.mxu0 0.0
        %564 = vmatprep.subr.mxu0 0.0
        %565 = vmatpush2.msra.mxu0 0.0
        %566 = vmatprep.subr.mxu0 0.0
        %567 = vmatpush2.msra.mxu0 0.0
        %568 = vmatprep.subr.mxu0 0.0
        %569 = vmatpush2.msra.mxu0 0.0
        %570 = vmatprep.subr.mxu0 0.0
        %571 = vmatpush2.msra.mxu0 0.0
        %572 = vmatprep.mubr.f32.mxu0 0.0
        %573 = vmatmul.mubr.f32.gmra.mxu0 %v506
        %v574 = vpop.f32.mrf.mxu0
        %v575 = vadd.f32 0.0, %v574
        %v576 = vpop.f32.mrf.mxu0
        %577 = vdwg.mxu0
        %578 = vst.msk [vmem:[%s396] sm:$0xff] %vm407, %v575
        %s579 = sand.u32 %s177, 1
        %s580 = scalar_lea.sflag [#allocation4], %s579
        %s581 = sand.u32 %s177, 1
        %s582 = smul.addr %s581, 8
        %s583 = scalar_lea.vmem [#allocation10], %s582
        %s584 = sand.u32 %s207, 1
        %s585 = scalar_lea.sflag [#allocation12], %s584
        %s586 = sand.u32 %s207, 1
        %s587 = smul.addr %s586, 8
        %s588 = scalar_lea.vmem [#allocation11], %s587
        // Predicated region
        $region53: #{tpu_custom_call.1} parent=35 // pred_check
          %p589 = pneg %p187
        $region54: #{tpu_custom_call.1} parent=35 // pred_check_branch
          %591 = sbr.rel (%p589) target = $region56
        $region55: #{tpu_custom_call.1} parent=35 // pred_region
          %s593 = ssub.s32 128, 128
          %594 = vsyncadd %s580, %s593
          %s595 = sadd.s32 %s39, %s38
          %s596 = smul.addr %s37, 4
          %s597 = sadd.s32 %s595, %s596
          %s598 = smul.addr %s597, 128
          %s599 = scalar_lea.hbm %s4, %s598
          %s601 = sshll.u32 %s583, 4
          %s602 = int_to_ptr.vmem [resolvable:$true] %s601
          %604 = dma.vmem_to_hbm [thread:$0]  %s602, 128, %s599, %s580
        $region56: #{tpu_custom_call.1} parent=35 // pred_fallthru
          _
        // Predicated region
        $region57: #{tpu_custom_call.1} parent=35 // pred_check
          %p605 = pneg %p217
        $region58: #{tpu_custom_call.1} parent=35 // pred_check_branch
          %607 = sbr.rel (%p605) target = $region60
        $region59: #{tpu_custom_call.1} parent=35 // pred_region
          %s609 = ssub.s32 128, 128
          %610 = vsyncadd %s585, %s609
          %s611 = sadd.s32 %s39, %s38
          %s612 = smul.addr %s37, 4
          %s613 = sadd.s32 %s611, %s612
          %s614 = smul.addr %s613, 128
          %s615 = scalar_lea.hbm %s5, %s614
          %s617 = sshll.u32 %s588, 4
          %s618 = int_to_ptr.vmem [resolvable:$true] %s617
          %620 = dma.vmem_to_hbm [thread:$0]  %s618, 128, %s615, %s585
        $region60: #{tpu_custom_call.1} parent=35 // pred_fallthru
          _
      $region36: #{tpu_custom_call.1} parent=5 // pred_fallthru
        _
      %p621 = scmp.le.s32.totalorder 2, %s27
      // Predicated region
      $region61: #{tpu_custom_call.1} parent=5 // pred_check
        %p622 = pneg %p621
      $region62: #{tpu_custom_call.1} parent=5 // pred_check_branch
        %624 = sbr.rel (%p622) target = $region64
      $region63: #{tpu_custom_call.1} parent=5 // pred_region
        %s625 = ssub.s32 %s27, 2
        // Predicated region
        $region65: #{tpu_custom_call.1} parent=63 // pred_check
          %p626 = pneg %p193
        $region66: #{tpu_custom_call.1} parent=63 // pred_check_branch
          %628 = sbr.rel (%p626) target = $region68
        $region67: #{tpu_custom_call.1} parent=63 // pred_region
          %s629 = sand.u32 %s178, 1
          %s630 = scalar_lea.sflag [#allocation4], %s629
          %s631 = sand.u32 %s178, 1
          %s632 = smul.addr %s631, 8
          %s633 = scalar_lea.vmem [#allocation10], %s632
          %634 = dma.done %s630, 128
        $region68: #{tpu_custom_call.1} parent=63 // pred_fallthru
          _
        // Predicated region
        $region69: #{tpu_custom_call.1} parent=63 // pred_check
          %p635 = pneg %p223
        $region70: #{tpu_custom_call.1} parent=63 // pred_check_branch
          %637 = sbr.rel (%p635) target = $region72
        $region71: #{tpu_custom_call.1} parent=63 // pred_region
          %s638 = sand.u32 %s208, 1
          %s639 = scalar_lea.sflag [#allocation12], %s638
          %s640 = sand.u32 %s208, 1
          %s641 = smul.addr %s640, 8
          %s642 = scalar_lea.vmem [#allocation11], %s641
          %643 = dma.done %s639, 128
        $region72: #{tpu_custom_call.1} parent=63 // pred_fallthru
          _
      $region64: #{tpu_custom_call.1} parent=5 // pred_fallthru
        _
    $region6: #{tpu_custom_call.1} parent=1 // loop_footer
      %s31 = sadd.s32 1, %s27
    $region7: #{tpu_custom_call.1} parent=1 // loop_footer_branch
      %26 = sbr.rel target = $region3
    $region8: #{tpu_custom_call.1} parent=1 // loop_exit
      _
    %644 = vsyncpa [#allocation3], 1
    %s645 = scalar_lea.sflag [#allocation3], 1
    %646 = vsyncpa %s645, 1
    %647 = vsyncpa [#allocation6], 1
    %s648 = scalar_lea.sflag [#allocation6], 1
    %649 = vsyncpa %s648, 1
    %650 = vsyncpa [#allocation9], 1
    %s651 = scalar_lea.sflag [#allocation9], 1
    %652 = vsyncpa %s651, 1
    %653 = vsyncpa [#allocation4], 1
    %s654 = scalar_lea.sflag [#allocation4], 1
    %655 = vsyncpa %s654, 1
    %656 = vsyncpa [#allocation12], 1
    %s657 = scalar_lea.sflag [#allocation12], 1
    %658 = vsyncpa %s657, 1

</llo_original>
